<compile_context>
chip_gen: v5e
topology: v5e:2x2
jax: 0.10.0
libtpu: 0.0.40
codegen_flags: <defaults>
</compile_context>

<pallas_src>
import jax
import jax.numpy as jnp
import numpy as np
from jax import lax
from jax.experimental import pallas as pl
from jax.experimental.pallas import tpu as pltpu


def text_lstm2_kernel(
    x2d_ref,                                   # (S*Bp, E)  f32, seq-major flattened embeddings
    wih_f_ref, whh_f_ref, b_f_ref,             # (E,4H), (H,4H), (1,4H)   forward LSTM
    wih_b_ref, whh_b_ref, b_b_ref,             # (E,4H), (H,4H), (1,4H)   backward LSTM
    h0f_ref, c0f_ref, h0b_ref, c0b_ref,        # (Bp,H) each              initial states
    wf1_ref, bf1_ref,                          # (2H,200), (1,200)        f1[0]
    wf2_ref, bf2_ref,                          # (200,C),  (1,C)          f1[3]
    out_ref,                                   # (Bp, C) f32              softmax probabilities
    xp_ref,                                    # scratch (S*Bp, 4H) f32   hoisted input projection
):
    Bp, H = h0f_ref.shape
    S = x2d_ref.shape[0] // Bp

    # ---- (1) hoisted input projection: one big matmul, bias folded in ----
    xp_ref[...] = (
        jnp.dot(x2d_ref[...], wih_f_ref[...], preferred_element_type=jnp.float32)
        + b_f_ref[...]
    )

    def gates_to_hc(gates, c_prev):
        # gates is (Bp, 4H) = one full 128-lane row per sublane at H=32.
        # Two full-vreg EUP ops, then slice the i/f/g/o blocks (PyTorch gate order).
        sig = jax.nn.sigmoid(gates)
        th = jnp.tanh(gates)
        i = sig[:, 0 * H:1 * H]
        f = sig[:, 1 * H:2 * H]
        g = th[:, 2 * H:3 * H]
        o = sig[:, 3 * H:4 * H]
        c_new = f * c_prev + i * g
        h_new = o * jnp.tanh(c_new)
        return h_new, c_new

    # ---- (2) forward recurrence, fully unrolled (S static & small) ----
    whh_f = whh_f_ref[...]                     # hoist the weight load out of the loop
    h, c = h0f_ref[...], c0f_ref[...]
    for t in range(S):
        gates = xp_ref[pl.ds(t * Bp, Bp), :] + jnp.dot(
            h, whh_f, preferred_element_type=jnp.float32)
        h, c = gates_to_hc(gates, c)
    h_fwd_last = h                             # forward hidden at t = S-1

    # ---- (3) backward direction: only its first step contributes to output[-1] ----
    x_last = x2d_ref[pl.ds((S - 1) * Bp, Bp), :]
    gates_b = (
        jnp.dot(x_last, wih_b_ref[...], preferred_element_type=jnp.float32)
        + jnp.dot(h0b_ref[...], whh_b_ref[...], preferred_element_type=jnp.float32)
        + b_b_ref[...]
    )
    h_bwd_last, _ = gates_to_hc(gates_b, c0b_ref[...])   # backward hidden at t = S-1

    # ---- (4) f1 head: Linear -> Dropout(0.8) [identity in eval] -> ReLU -> Linear -> Softmax ----
    out_last = jnp.concatenate([h_fwd_last, h_bwd_last], axis=-1)         # (Bp, 2H)
    z = jnp.dot(out_last, wf1_ref[...], preferred_element_type=jnp.float32) + bf1_ref[...]
    z = jnp.maximum(z, 0.0)
    logits = jnp.dot(z, wf2_ref[...], preferred_element_type=jnp.float32) + bf2_ref[...]
    out_ref[...] = jax.nn.softmax(logits, axis=-1)


@jax.jit
def forward(params, x_tokens):
    # Embedding gather (glue, plain JAX), then seq-first permute like torch's x.permute(1,0,2).
    x = jnp.transpose(params["embedding"][x_tokens], (1, 0, 2)).astype(jnp.float32)  # (S,B,E)
    S, B, E = x.shape
    H = params["h0"].shape[-1]
    C = params["wf2"].shape[-1]

    # Pad the batch up to a full sublane group (8) so every vreg row carries real work.
    Bp = ((B + 7) // 8) * 8
    pad = Bp - B
    x = jnp.pad(x, ((0, 0), (0, pad), (0, 0)))
    h0 = jnp.pad(params["h0"], ((0, 0), (0, pad), (0, 0)))
    c0 = jnp.pad(params["c0"], ((0, 0), (0, pad), (0, 0)))
    x2d = x.reshape(S * Bp, E)                           # row t*Bp + b  <->  (t, b)

    args = [
        x2d,
        params["wih_f"], params["whh_f"], params["b_f"],
        params["wih_b"], params["whh_b"], params["b_b"],
        h0[0], c0[0], h0[1], c0[1],
        params["wf1"], params["bf1"],
        params["wf2"], params["bf2"],
    ]
    vmem = pl.BlockSpec(memory_space=pltpu.MemorySpace.VMEM)
    out = pl.pallas_call(
        text_lstm2_kernel,
        out_shape=jax.ShapeDtypeStruct((Bp, C), jnp.float32),
        in_specs=[vmem] * len(args),
        out_specs=vmem,
        scratch_shapes=[pltpu.VMEM((S * Bp, 4 * H), jnp.float32)],
    )(*args)
    return out[:B]


def forward_ref(params, x_tokens):
    """Pure-JAX reference (full bidirectional scan) for correctness checking."""
    x = jnp.transpose(params["embedding"][x_tokens], (1, 0, 2)).astype(jnp.float32)  # (S,B,E)
    H = params["h0"].shape[-1]

    def run_dir(wih, whh, b, h0, c0, reverse):
        def step(carry, x_t):
            h, c = carry
            gates = x_t @ wih + h @ whh + b
            i = jax.nn.sigmoid(gates[:, 0 * H:1 * H])
            f = jax.nn.sigmoid(gates[:, 1 * H:2 * H])
            g = jnp.tanh(gates[:, 2 * H:3 * H])
            o = jax.nn.sigmoid(gates[:, 3 * H:4 * H])
            c = f * c + i * g
            h = o * jnp.tanh(c)
            return (h, c), h

        _, hs = lax.scan(step, (h0, c0), x, reverse=reverse)
        return hs  # (S, B, H), hs[t] aligned with x[t]

    hf = run_dir(params["wih_f"], params["whh_f"], params["b_f"],
                 params["h0"][0], params["c0"][0], reverse=False)
    hb = run_dir(params["wih_b"], params["whh_b"], params["b_b"],
                 params["h0"][1], params["c0"][1], reverse=True)
    out_last = jnp.concatenate([hf[-1], hb[-1]], axis=-1)                 # output[-1], (B, 2H)

    z = jnp.maximum(out_last @ params["wf1"] + params["bf1"], 0.0)        # Dropout = identity (eval)
    logits = z @ params["wf2"] + params["bf2"]
    return jax.nn.softmax(logits, axis=-1)


def make_params(key, vocab_size, embed_size, hidden_size, num_classes, padding_index):
    H = hidden_size
    ks = jax.random.split(key, 12)

    def unif(k, shape, scale=0.1):
        return jax.random.uniform(k, shape, jnp.float32, -scale, scale)

    emb = jax.random.normal(ks[0], (vocab_size, embed_size), jnp.float32)
    emb = emb.at[padding_index].set(0.0)  # padding_idx row is zero
    return dict(
        embedding=emb,
        # LSTM weights stored pre-transposed (in_dim, 4H); biases = b_ih + b_hh folded together.
        wih_f=unif(ks[1], (embed_size, 4 * H)),
        whh_f=unif(ks[2], (H, 4 * H)),
        b_f=unif(ks[3], (1, 4 * H)),
        wih_b=unif(ks[4], (embed_size, 4 * H)),
        whh_b=unif(ks[5], (H, 4 * H)),
        b_b=unif(ks[6], (1, 4 * H)),
        wf1=unif(ks[7], (2 * H, 200)),
        bf1=unif(ks[8], (1, 200)),
        wf2=unif(ks[9], (200, num_classes)),
        bf2=unif(ks[10], (1, num_classes)),
    )


if __name__ == "__main__":
    vocab_size, embed_size, hidden_size = 50, 32, 32
    num_classes, padding_index = 5, 0
    B, S = 2, 8

    key = jax.random.PRNGKey(0)
    k_params, k_x, k_h0, k_c0 = jax.random.split(key, 4)

    params = make_params(k_params, vocab_size, embed_size, hidden_size,
                         num_classes, padding_index)
    # TODO(synk): torch draws fresh torch.randn h0/c0 every forward call; made deterministic here.
    params["h0"] = jax.random.normal(k_h0, (2, B, hidden_size), jnp.float32)
    params["c0"] = jax.random.normal(k_c0, (2, B, hidden_size), jnp.float32)

    x_tokens = jax.random.randint(k_x, (B, S), 0, vocab_size, dtype=jnp.int32)

    out = jax.block_until_ready(forward(params, x_tokens))
    ref = np.asarray(forward_ref(params, x_tokens))

    assert out.shape == (B, num_classes)
    np.testing.assert_allclose(np.asarray(out), ref, rtol=2e-3, atol=2e-3)

    print("KERNEL_OK")
</pallas_src>

<mosaic_0001>
module attributes {stable_mosaic.version = 11 : i64} {
  func.func @text_lstm2_kernel(%arg0: memref<64x32xf32, #tpu.memory_space<vmem>>, %arg1: memref<32x128xf32, #tpu.memory_space<vmem>>, %arg2: memref<32x128xf32, #tpu.memory_space<vmem>>, %arg3: memref<1x128xf32, #tpu.memory_space<vmem>>, %arg4: memref<32x128xf32, #tpu.memory_space<vmem>>, %arg5: memref<32x128xf32, #tpu.memory_space<vmem>>, %arg6: memref<1x128xf32, #tpu.memory_space<vmem>>, %arg7: memref<8x32xf32, #tpu.memory_space<vmem>>, %arg8: memref<8x32xf32, #tpu.memory_space<vmem>>, %arg9: memref<8x32xf32, #tpu.memory_space<vmem>>, %arg10: memref<8x32xf32, #tpu.memory_space<vmem>>, %arg11: memref<64x200xf32, #tpu.memory_space<vmem>>, %arg12: memref<1x200xf32, #tpu.memory_space<vmem>>, %arg13: memref<200x5xf32, #tpu.memory_space<vmem>>, %arg14: memref<1x5xf32, #tpu.memory_space<vmem>>, %arg15: memref<8x5xf32, #tpu.memory_space<vmem>>, %arg16: memref<64x128xf32, #tpu.memory_space<vmem>>) attributes {dimension_semantics = [], scalar_prefetch = 0 : i64, scratch_operands = 1 : i64, tpu.core_type = #tpu.core_type<tc>} {
    %c0 = arith.constant 0 : index
    %c0_0 = arith.constant 0 : index
    %0 = vector.load %arg0[%c0, %c0_0] : memref<64x32xf32, #tpu.memory_space<vmem>>, vector<64x32xf32>
    %c0_1 = arith.constant 0 : index
    %c0_2 = arith.constant 0 : index
    %1 = vector.load %arg1[%c0_1, %c0_2] : memref<32x128xf32, #tpu.memory_space<vmem>>, vector<32x128xf32>
    %cst = arith.constant dense<0.000000e+00> : vector<64x128xf32>
    %2 = tpu.matmul %0, %1, %cst {dimension_numbers = #tpu.dot_dimension_numbers<[1], [0], [0], [1], [0, 0, 1, 1], [], []>} : vector<64x32xf32>, vector<32x128xf32>, vector<64x128xf32> -> vector<64x128xf32>
    %c0_3 = arith.constant 0 : index
    %c0_4 = arith.constant 0 : index
    %3 = vector.load %arg3[%c0_3, %c0_4] : memref<1x128xf32, #tpu.memory_space<vmem>>, vector<1x128xf32>
    %4 = vector.broadcast %3 : vector<1x128xf32> to vector<64x128xf32>
    %5 = arith.addf %2, %4 : vector<64x128xf32>
    %c0_5 = arith.constant 0 : index
    %c0_6 = arith.constant 0 : index
    %6 = vector.load %arg16[%c0_5, %c0_6] : memref<64x128xf32, #tpu.memory_space<vmem>>, vector<64x128xf32>
    tpu.vector_store %arg16[%c0_5, %c0_6], %5 {strides = array<i32>} : memref<64x128xf32, #tpu.memory_space<vmem>>, vector<64x128xf32>,
    %c0_7 = arith.constant 0 : index
    %c0_8 = arith.constant 0 : index
    %7 = vector.load %arg2[%c0_7, %c0_8] : memref<32x128xf32, #tpu.memory_space<vmem>>, vector<32x128xf32>
    %c0_9 = arith.constant 0 : index
    %c0_10 = arith.constant 0 : index
    %8 = vector.load %arg7[%c0_9, %c0_10] : memref<8x32xf32, #tpu.memory_space<vmem>>, vector<8x32xf32>
    %c0_11 = arith.constant 0 : index
    %c0_12 = arith.constant 0 : index
    %9 = vector.load %arg8[%c0_11, %c0_12] : memref<8x32xf32, #tpu.memory_space<vmem>>, vector<8x32xf32>
    %c0_13 = arith.constant 0 : index
    %c0_14 = arith.constant 0 : index
    %10 = vector.load %arg16[%c0_13, %c0_14] : memref<64x128xf32, #tpu.memory_space<vmem>>, vector<8x128xf32>
    %cst_15 = arith.constant dense<0.000000e+00> : vector<8x128xf32>
    %11 = tpu.matmul %8, %7, %cst_15 {dimension_numbers = #tpu.dot_dimension_numbers<[1], [0], [0], [1], [0, 0, 1, 1], [], []>} : vector<8x32xf32>, vector<32x128xf32>, vector<8x128xf32> -> vector<8x128xf32>
    %12 = arith.addf %10, %11 : vector<8x128xf32>
    %13 = arith.negf %12 : vector<8x128xf32>
    %14 = math.exp %13 : vector<8x128xf32>
    %cst_16 = arith.constant 1.000000e+00 : f32
    %15 = vector.broadcast %cst_16 : f32 to vector<8x128xf32>
    %16 = arith.addf %15, %14 : vector<8x128xf32>
    %17 = arith.divf %15, %16 : vector<8x128xf32>
    %18 = math.tanh %12 : vector<8x128xf32>
    %19 = vector.extract_strided_slice %17 {offsets = [0, 0], sizes = [8, 32], strides = [1, 1]} : vector<8x128xf32> to vector<8x32xf32>
    %20 = vector.extract_strided_slice %17 {offsets = [0, 32], sizes = [8, 32], strides = [1, 1]} : vector<8x128xf32> to vector<8x32xf32>
    %21 = vector.extract_strided_slice %18 {offsets = [0, 64], sizes = [8, 32], strides = [1, 1]} : vector<8x128xf32> to vector<8x32xf32>
    %22 = vector.extract_strided_slice %17 {offsets = [0, 96], sizes = [8, 32], strides = [1, 1]} : vector<8x128xf32> to vector<8x32xf32>
    %23 = arith.mulf %20, %9 : vector<8x32xf32>
    %24 = arith.mulf %19, %21 : vector<8x32xf32>
    %25 = arith.addf %23, %24 : vector<8x32xf32>
    %26 = math.tanh %25 : vector<8x32xf32>
    %27 = arith.mulf %22, %26 : vector<8x32xf32>
    %c8 = arith.constant 8 : index
    %c0_17 = arith.constant 0 : index
    %28 = vector.load %arg16[%c8, %c0_17] : memref<64x128xf32, #tpu.memory_space<vmem>>, vector<8x128xf32>
    %cst_18 = arith.constant dense<0.000000e+00> : vector<8x128xf32>
    %29 = tpu.matmul %27, %7, %cst_18 {dimension_numbers = #tpu.dot_dimension_numbers<[1], [0], [0], [1], [0, 0, 1, 1], [], []>} : vector<8x32xf32>, vector<32x128xf32>, vector<8x128xf32> -> vector<8x128xf32>
    %30 = arith.addf %28, %29 : vector<8x128xf32>
    %31 = arith.negf %30 : vector<8x128xf32>
    %32 = math.exp %31 : vector<8x128xf32>
    %cst_19 = arith.constant 1.000000e+00 : f32
    %33 = vector.broadcast %cst_19 : f32 to vector<8x128xf32>
    %34 = arith.addf %33, %32 : vector<8x128xf32>
    %35 = arith.divf %33, %34 : vector<8x128xf32>
    %36 = math.tanh %30 : vector<8x128xf32>
    %37 = vector.extract_strided_slice %35 {offsets = [0, 0], sizes = [8, 32], strides = [1, 1]} : vector<8x128xf32> to vector<8x32xf32>
    %38 = vector.extract_strided_slice %35 {offsets = [0, 32], sizes = [8, 32], strides = [1, 1]} : vector<8x128xf32> to vector<8x32xf32>
    %39 = vector.extract_strided_slice %36 {offsets = [0, 64], sizes = [8, 32], strides = [1, 1]} : vector<8x128xf32> to vector<8x32xf32>
    %40 = vector.extract_strided_slice %35 {offsets = [0, 96], sizes = [8, 32], strides = [1, 1]} : vector<8x128xf32> to vector<8x32xf32>
    %41 = arith.mulf %38, %25 : vector<8x32xf32>
    %42 = arith.mulf %37, %39 : vector<8x32xf32>
    %43 = arith.addf %41, %42 : vector<8x32xf32>
    %44 = math.tanh %43 : vector<8x32xf32>
    %45 = arith.mulf %40, %44 : vector<8x32xf32>
    %c16 = arith.constant 16 : index
    %c0_20 = arith.constant 0 : index
    %46 = vector.load %arg16[%c16, %c0_20] : memref<64x128xf32, #tpu.memory_space<vmem>>, vector<8x128xf32>
    %cst_21 = arith.constant dense<0.000000e+00> : vector<8x128xf32>
    %47 = tpu.matmul %45, %7, %cst_21 {dimension_numbers = #tpu.dot_dimension_numbers<[1], [0], [0], [1], [0, 0, 1, 1], [], []>} : vector<8x32xf32>, vector<32x128xf32>, vector<8x128xf32> -> vector<8x128xf32>
    %48 = arith.addf %46, %47 : vector<8x128xf32>
    %49 = arith.negf %48 : vector<8x128xf32>
    %50 = math.exp %49 : vector<8x128xf32>
    %cst_22 = arith.constant 1.000000e+00 : f32
    %51 = vector.broadcast %cst_22 : f32 to vector<8x128xf32>
    %52 = arith.addf %51, %50 : vector<8x128xf32>
    %53 = arith.divf %51, %52 : vector<8x128xf32>
    %54 = math.tanh %48 : vector<8x128xf32>
    %55 = vector.extract_strided_slice %53 {offsets = [0, 0], sizes = [8, 32], strides = [1, 1]} : vector<8x128xf32> to vector<8x32xf32>
    %56 = vector.extract_strided_slice %53 {offsets = [0, 32], sizes = [8, 32], strides = [1, 1]} : vector<8x128xf32> to vector<8x32xf32>
    %57 = vector.extract_strided_slice %54 {offsets = [0, 64], sizes = [8, 32], strides = [1, 1]} : vector<8x128xf32> to vector<8x32xf32>
    %58 = vector.extract_strided_slice %53 {offsets = [0, 96], sizes = [8, 32], strides = [1, 1]} : vector<8x128xf32> to vector<8x32xf32>
    %59 = arith.mulf %56, %43 : vector<8x32xf32>
    %60 = arith.mulf %55, %57 : vector<8x32xf32>
    %61 = arith.addf %59, %60 : vector<8x32xf32>
    %62 = math.tanh %61 : vector<8x32xf32>
    %63 = arith.mulf %58, %62 : vector<8x32xf32>
    %c24 = arith.constant 24 : index
    %c0_23 = arith.constant 0 : index
    %64 = vector.load %arg16[%c24, %c0_23] : memref<64x128xf32, #tpu.memory_space<vmem>>, vector<8x128xf32>
    %cst_24 = arith.constant dense<0.000000e+00> : vector<8x128xf32>
    %65 = tpu.matmul %63, %7, %cst_24 {dimension_numbers = #tpu.dot_dimension_numbers<[1], [0], [0], [1], [0, 0, 1, 1], [], []>} : vector<8x32xf32>, vector<32x128xf32>, vector<8x128xf32> -> vector<8x128xf32>
    %66 = arith.addf %64, %65 : vector<8x128xf32>
    %67 = arith.negf %66 : vector<8x128xf32>
    %68 = math.exp %67 : vector<8x128xf32>
    %cst_25 = arith.constant 1.000000e+00 : f32
    %69 = vector.broadcast %cst_25 : f32 to vector<8x128xf32>
    %70 = arith.addf %69, %68 : vector<8x128xf32>
    %71 = arith.divf %69, %70 : vector<8x128xf32>
    %72 = math.tanh %66 : vector<8x128xf32>
    %73 = vector.extract_strided_slice %71 {offsets = [0, 0], sizes = [8, 32], strides = [1, 1]} : vector<8x128xf32> to vector<8x32xf32>
    %74 = vector.extract_strided_slice %71 {offsets = [0, 32], sizes = [8, 32], strides = [1, 1]} : vector<8x128xf32> to vector<8x32xf32>
    %75 = vector.extract_strided_slice %72 {offsets = [0, 64], sizes = [8, 32], strides = [1, 1]} : vector<8x128xf32> to vector<8x32xf32>
    %76 = vector.extract_strided_slice %71 {offsets = [0, 96], sizes = [8, 32], strides = [1, 1]} : vector<8x128xf32> to vector<8x32xf32>
    %77 = arith.mulf %74, %61 : vector<8x32xf32>
    %78 = arith.mulf %73, %75 : vector<8x32xf32>
    %79 = arith.addf %77, %78 : vector<8x32xf32>
    %80 = math.tanh %79 : vector<8x32xf32>
    %81 = arith.mulf %76, %80 : vector<8x32xf32>
    %c32 = arith.constant 32 : index
    %c0_26 = arith.constant 0 : index
    %82 = vector.load %arg16[%c32, %c0_26] : memref<64x128xf32, #tpu.memory_space<vmem>>, vector<8x128xf32>
    %cst_27 = arith.constant dense<0.000000e+00> : vector<8x128xf32>
    %83 = tpu.matmul %81, %7, %cst_27 {dimension_numbers = #tpu.dot_dimension_numbers<[1], [0], [0], [1], [0, 0, 1, 1], [], []>} : vector<8x32xf32>, vector<32x128xf32>, vector<8x128xf32> -> vector<8x128xf32>
    %84 = arith.addf %82, %83 : vector<8x128xf32>
    %85 = arith.negf %84 : vector<8x128xf32>
    %86 = math.exp %85 : vector<8x128xf32>
    %cst_28 = arith.constant 1.000000e+00 : f32
    %87 = vector.broadcast %cst_28 : f32 to vector<8x128xf32>
    %88 = arith.addf %87, %86 : vector<8x128xf32>
    %89 = arith.divf %87, %88 : vector<8x128xf32>
    %90 = math.tanh %84 : vector<8x128xf32>
    %91 = vector.extract_strided_slice %89 {offsets = [0, 0], sizes = [8, 32], strides = [1, 1]} : vector<8x128xf32> to vector<8x32xf32>
    %92 = vector.extract_strided_slice %89 {offsets = [0, 32], sizes = [8, 32], strides = [1, 1]} : vector<8x128xf32> to vector<8x32xf32>
    %93 = vector.extract_strided_slice %90 {offsets = [0, 64], sizes = [8, 32], strides = [1, 1]} : vector<8x128xf32> to vector<8x32xf32>
    %94 = vector.extract_strided_slice %89 {offsets = [0, 96], sizes = [8, 32], strides = [1, 1]} : vector<8x128xf32> to vector<8x32xf32>
    %95 = arith.mulf %92, %79 : vector<8x32xf32>
    %96 = arith.mulf %91, %93 : vector<8x32xf32>
    %97 = arith.addf %95, %96 : vector<8x32xf32>
    %98 = math.tanh %97 : vector<8x32xf32>
    %99 = arith.mulf %94, %98 : vector<8x32xf32>
    %c40 = arith.constant 40 : index
    %c0_29 = arith.constant 0 : index
    %100 = vector.load %arg16[%c40, %c0_29] : memref<64x128xf32, #tpu.memory_space<vmem>>, vector<8x128xf32>
    %cst_30 = arith.constant dense<0.000000e+00> : vector<8x128xf32>
    %101 = tpu.matmul %99, %7, %cst_30 {dimension_numbers = #tpu.dot_dimension_numbers<[1], [0], [0], [1], [0, 0, 1, 1], [], []>} : vector<8x32xf32>, vector<32x128xf32>, vector<8x128xf32> -> vector<8x128xf32>
    %102 = arith.addf %100, %101 : vector<8x128xf32>
    %103 = arith.negf %102 : vector<8x128xf32>
    %104 = math.exp %103 : vector<8x128xf32>
    %cst_31 = arith.constant 1.000000e+00 : f32
    %105 = vector.broadcast %cst_31 : f32 to vector<8x128xf32>
    %106 = arith.addf %105, %104 : vector<8x128xf32>
    %107 = arith.divf %105, %106 : vector<8x128xf32>
    %108 = math.tanh %102 : vector<8x128xf32>
    %109 = vector.extract_strided_slice %107 {offsets = [0, 0], sizes = [8, 32], strides = [1, 1]} : vector<8x128xf32> to vector<8x32xf32>
    %110 = vector.extract_strided_slice %107 {offsets = [0, 32], sizes = [8, 32], strides = [1, 1]} : vector<8x128xf32> to vector<8x32xf32>
    %111 = vector.extract_strided_slice %108 {offsets = [0, 64], sizes = [8, 32], strides = [1, 1]} : vector<8x128xf32> to vector<8x32xf32>
    %112 = vector.extract_strided_slice %107 {offsets = [0, 96], sizes = [8, 32], strides = [1, 1]} : vector<8x128xf32> to vector<8x32xf32>
    %113 = arith.mulf %110, %97 : vector<8x32xf32>
    %114 = arith.mulf %109, %111 : vector<8x32xf32>
    %115 = arith.addf %113, %114 : vector<8x32xf32>
    %116 = math.tanh %115 : vector<8x32xf32>
    %117 = arith.mulf %112, %116 : vector<8x32xf32>
    %c48 = arith.constant 48 : index
    %c0_32 = arith.constant 0 : index
    %118 = vector.load %arg16[%c48, %c0_32] : memref<64x128xf32, #tpu.memory_space<vmem>>, vector<8x128xf32>
    %cst_33 = arith.constant dense<0.000000e+00> : vector<8x128xf32>
    %119 = tpu.matmul %117, %7, %cst_33 {dimension_numbers = #tpu.dot_dimension_numbers<[1], [0], [0], [1], [0, 0, 1, 1], [], []>} : vector<8x32xf32>, vector<32x128xf32>, vector<8x128xf32> -> vector<8x128xf32>
    %120 = arith.addf %118, %119 : vector<8x128xf32>
    %121 = arith.negf %120 : vector<8x128xf32>
    %122 = math.exp %121 : vector<8x128xf32>
    %cst_34 = arith.constant 1.000000e+00 : f32
    %123 = vector.broadcast %cst_34 : f32 to vector<8x128xf32>
    %124 = arith.addf %123, %122 : vector<8x128xf32>
    %125 = arith.divf %123, %124 : vector<8x128xf32>
    %126 = math.tanh %120 : vector<8x128xf32>
    %127 = vector.extract_strided_slice %125 {offsets = [0, 0], sizes = [8, 32], strides = [1, 1]} : vector<8x128xf32> to vector<8x32xf32>
    %128 = vector.extract_strided_slice %125 {offsets = [0, 32], sizes = [8, 32], strides = [1, 1]} : vector<8x128xf32> to vector<8x32xf32>
    %129 = vector.extract_strided_slice %126 {offsets = [0, 64], sizes = [8, 32], strides = [1, 1]} : vector<8x128xf32> to vector<8x32xf32>
    %130 = vector.extract_strided_slice %125 {offsets = [0, 96], sizes = [8, 32], strides = [1, 1]} : vector<8x128xf32> to vector<8x32xf32>
    %131 = arith.mulf %128, %115 : vector<8x32xf32>
    %132 = arith.mulf %127, %129 : vector<8x32xf32>
    %133 = arith.addf %131, %132 : vector<8x32xf32>
    %134 = math.tanh %133 : vector<8x32xf32>
    %135 = arith.mulf %130, %134 : vector<8x32xf32>
    %c56 = arith.constant 56 : index
    %c0_35 = arith.constant 0 : index
    %136 = vector.load %arg16[%c56, %c0_35] : memref<64x128xf32, #tpu.memory_space<vmem>>, vector<8x128xf32>
    %cst_36 = arith.constant dense<0.000000e+00> : vector<8x128xf32>
    %137 = tpu.matmul %135, %7, %cst_36 {dimension_numbers = #tpu.dot_dimension_numbers<[1], [0], [0], [1], [0, 0, 1, 1], [], []>} : vector<8x32xf32>, vector<32x128xf32>, vector<8x128xf32> -> vector<8x128xf32>
    %138 = arith.addf %136, %137 : vector<8x128xf32>
    %139 = arith.negf %138 : vector<8x128xf32>
    %140 = math.exp %139 : vector<8x128xf32>
    %cst_37 = arith.constant 1.000000e+00 : f32
    %141 = vector.broadcast %cst_37 : f32 to vector<8x128xf32>
    %142 = arith.addf %141, %140 : vector<8x128xf32>
    %143 = arith.divf %141, %142 : vector<8x128xf32>
    %144 = math.tanh %138 : vector<8x128xf32>
    %145 = vector.extract_strided_slice %143 {offsets = [0, 0], sizes = [8, 32], strides = [1, 1]} : vector<8x128xf32> to vector<8x32xf32>
    %146 = vector.extract_strided_slice %143 {offsets = [0, 32], sizes = [8, 32], strides = [1, 1]} : vector<8x128xf32> to vector<8x32xf32>
    %147 = vector.extract_strided_slice %144 {offsets = [0, 64], sizes = [8, 32], strides = [1, 1]} : vector<8x128xf32> to vector<8x32xf32>
    %148 = vector.extract_strided_slice %143 {offsets = [0, 96], sizes = [8, 32], strides = [1, 1]} : vector<8x128xf32> to vector<8x32xf32>
    %149 = arith.mulf %146, %133 : vector<8x32xf32>
    %150 = arith.mulf %145, %147 : vector<8x32xf32>
    %151 = arith.addf %149, %150 : vector<8x32xf32>
    %152 = math.tanh %151 : vector<8x32xf32>
    %153 = arith.mulf %148, %152 : vector<8x32xf32>
    %c56_38 = arith.constant 56 : index
    %c0_39 = arith.constant 0 : index
    %154 = vector.load %arg0[%c56_38, %c0_39] : memref<64x32xf32, #tpu.memory_space<vmem>>, vector<8x32xf32>
    %c0_40 = arith.constant 0 : index
    %c0_41 = arith.constant 0 : index
    %155 = vector.load %arg4[%c0_40, %c0_41] : memref<32x128xf32, #tpu.memory_space<vmem>>, vector<32x128xf32>
    %cst_42 = arith.constant dense<0.000000e+00> : vector<8x128xf32>
    %156 = tpu.matmul %154, %155, %cst_42 {dimension_numbers = #tpu.dot_dimension_numbers<[1], [0], [0], [1], [0, 0, 1, 1], [], []>} : vector<8x32xf32>, vector<32x128xf32>, vector<8x128xf32> -> vector<8x128xf32>
    %c0_43 = arith.constant 0 : index
    %c0_44 = arith.constant 0 : index
    %157 = vector.load %arg9[%c0_43, %c0_44] : memref<8x32xf32, #tpu.memory_space<vmem>>, vector<8x32xf32>
    %c0_45 = arith.constant 0 : index
    %c0_46 = arith.constant 0 : index
    %158 = vector.load %arg5[%c0_45, %c0_46] : memref<32x128xf32, #tpu.memory_space<vmem>>, vector<32x128xf32>
    %cst_47 = arith.constant dense<0.000000e+00> : vector<8x128xf32>
    %159 = tpu.matmul %157, %158, %cst_47 {dimension_numbers = #tpu.dot_dimension_numbers<[1], [0], [0], [1], [0, 0, 1, 1], [], []>} : vector<8x32xf32>, vector<32x128xf32>, vector<8x128xf32> -> vector<8x128xf32>
    %160 = arith.addf %156, %159 : vector<8x128xf32>
    %c0_48 = arith.constant 0 : index
    %c0_49 = arith.constant 0 : index
    %161 = vector.load %arg6[%c0_48, %c0_49] : memref<1x128xf32, #tpu.memory_space<vmem>>, vector<1x128xf32>
    %162 = vector.broadcast %161 : vector<1x128xf32> to vector<8x128xf32>
    %163 = arith.addf %160, %162 : vector<8x128xf32>
    %c0_50 = arith.constant 0 : index
    %c0_51 = arith.constant 0 : index
    %164 = vector.load %arg10[%c0_50, %c0_51] : memref<8x32xf32, #tpu.memory_space<vmem>>, vector<8x32xf32>
    %165 = arith.negf %163 : vector<8x128xf32>
    %166 = math.exp %165 : vector<8x128xf32>
    %cst_52 = arith.constant 1.000000e+00 : f32
    %167 = vector.broadcast %cst_52 : f32 to vector<8x128xf32>
    %168 = arith.addf %167, %166 : vector<8x128xf32>
    %169 = arith.divf %167, %168 : vector<8x128xf32>
    %170 = math.tanh %163 : vector<8x128xf32>
    %171 = vector.extract_strided_slice %169 {offsets = [0, 0], sizes = [8, 32], strides = [1, 1]} : vector<8x128xf32> to vector<8x32xf32>
    %172 = vector.extract_strided_slice %169 {offsets = [0, 32], sizes = [8, 32], strides = [1, 1]} : vector<8x128xf32> to vector<8x32xf32>
    %173 = vector.extract_strided_slice %170 {offsets = [0, 64], sizes = [8, 32], strides = [1, 1]} : vector<8x128xf32> to vector<8x32xf32>
    %174 = vector.extract_strided_slice %169 {offsets = [0, 96], sizes = [8, 32], strides = [1, 1]} : vector<8x128xf32> to vector<8x32xf32>
    %175 = arith.mulf %172, %164 : vector<8x32xf32>
    %176 = arith.mulf %171, %173 : vector<8x32xf32>
    %177 = arith.addf %175, %176 : vector<8x32xf32>
    %178 = math.tanh %177 : vector<8x32xf32>
    %179 = arith.mulf %174, %178 : vector<8x32xf32>
    %180 = tpu.concatenate %153, %179 in 1 : vector<8x32xf32>, vector<8x32xf32> -> vector<8x64xf32>
    %c0_53 = arith.constant 0 : index
    %c0_54 = arith.constant 0 : index
    %181 = vector.load %arg11[%c0_53, %c0_54] : memref<64x200xf32, #tpu.memory_space<vmem>>, vector<64x200xf32>
    %cst_55 = arith.constant dense<0.000000e+00> : vector<8x200xf32>
    %182 = tpu.matmul %180, %181, %cst_55 {dimension_numbers = #tpu.dot_dimension_numbers<[1], [0], [0], [1], [0, 0, 1, 1], [], []>} : vector<8x64xf32>, vector<64x200xf32>, vector<8x200xf32> -> vector<8x200xf32>
    %c0_56 = arith.constant 0 : index
    %c0_57 = arith.constant 0 : index
    %183 = vector.load %arg12[%c0_56, %c0_57] : memref<1x200xf32, #tpu.memory_space<vmem>>, vector<1x200xf32>
    %184 = vector.broadcast %183 : vector<1x200xf32> to vector<8x200xf32>
    %185 = arith.addf %182, %184 : vector<8x200xf32>
    %cst_58 = arith.constant 0.000000e+00 : f32
    %186 = vector.broadcast %cst_58 : f32 to vector<8x200xf32>
    %187 = arith.maximumf %185, %186 : vector<8x200xf32>
    %c0_59 = arith.constant 0 : index
    %c0_60 = arith.constant 0 : index
    %188 = vector.load %arg13[%c0_59, %c0_60] : memref<200x5xf32, #tpu.memory_space<vmem>>, vector<200x5xf32>
    %cst_61 = arith.constant dense<0.000000e+00> : vector<8x5xf32>
    %189 = tpu.matmul %187, %188, %cst_61 {dimension_numbers = #tpu.dot_dimension_numbers<[1], [0], [0], [1], [0, 0, 1, 1], [], []>} : vector<8x200xf32>, vector<200x5xf32>, vector<8x5xf32> -> vector<8x5xf32>
    %c0_62 = arith.constant 0 : index
    %c0_63 = arith.constant 0 : index
    %190 = vector.load %arg14[%c0_62, %c0_63] : memref<1x5xf32, #tpu.memory_space<vmem>>, vector<1x5xf32>
    %191 = vector.broadcast %190 : vector<1x5xf32> to vector<8x5xf32>
    %192 = arith.addf %189, %191 : vector<8x5xf32>
    %cst_64 = arith.constant dense<0xFF800000> : vector<8xf32>
    %193 = vector.multi_reduction <maximumf>, %192, %cst_64 [1] : vector<8x5xf32> to vector<8xf32>
    %cst_65 = arith.constant 0xFF800000 : f32
    %194 = vector.broadcast %cst_65 : f32 to vector<8xf32>
    %195 = arith.maximumf %194, %193 : vector<8xf32>
    %196 = vector.shape_cast %195 : vector<8xf32> to vector<8x1xf32>
    %197 = vector.broadcast %196 : vector<8x1xf32> to vector<8x5xf32>
    %198 = arith.subf %192, %197 : vector<8x5xf32>
    %199 = math.exp %198 : vector<8x5xf32>
    %cst_66 = arith.constant dense<0.000000e+00> : vector<8xf32>
    %200 = vector.multi_reduction <add>, %199, %cst_66 [1] : vector<8x5xf32> to vector<8xf32>
    %201 = vector.shape_cast %200 : vector<8xf32> to vector<8x1xf32>
    %202 = vector.broadcast %201 : vector<8x1xf32> to vector<8x5xf32>
    %203 = arith.divf %199, %202 : vector<8x5xf32>
    %c0_67 = arith.constant 0 : index
    %c0_68 = arith.constant 0 : index
    %204 = vector.load %arg15[%c0_67, %c0_68] : memref<8x5xf32, #tpu.memory_space<vmem>>, vector<8x5xf32>
    tpu.vector_store %arg15[%c0_67, %c0_68], %203 {strides = array<i32>} : memref<8x5xf32, #tpu.memory_space<vmem>>, vector<8x5xf32>,
    return
  }
}

</mosaic_0001>

<llo_original>
// kernel: forward.1
$region0: #{forward.1}
  #allocation0 [shape = 'u32[]', space=smem, size = 0x4, offset = 0x4, fixed_abs, tag = 'smem constant byte address 0x4 - core index']
  #allocation1 [shape = 'u32[72,128]{1,0:T(1,128)}', space=vmem, size = 0x9000, scoped, tag = 'internal scratch']
  #allocation2 [shape = 'f32[64,128]{1,0:T(8,128)}', space=vmem, size = 0x8000, scoped, tag = 'scratch operand']
  %s0 = inlined_call_operand.vmem [shape: f32[64,32], index: 0, kind: input, shape index: {}]
  %s1 = inlined_call_operand.vmem [shape: f32[32,128], index: 1, kind: input, shape index: {}]
  %s2 = inlined_call_operand.vmem [shape: f32[32,128], index: 2, kind: input, shape index: {}]
  %s3 = inlined_call_operand.vmem [shape: f32[1,128], index: 3, kind: input, shape index: {}]
  %s4 = inlined_call_operand.vmem [shape: f32[32,128], index: 4, kind: input, shape index: {}]
  %s5 = inlined_call_operand.vmem [shape: f32[32,128], index: 5, kind: input, shape index: {}]
  %s6 = inlined_call_operand.vmem [shape: f32[1,128], index: 6, kind: input, shape index: {}]
  %s7 = inlined_call_operand.vmem [shape: f32[8,32], index: 7, kind: input, shape index: {}]
  %s8 = inlined_call_operand.vmem [shape: f32[8,32], index: 8, kind: input, shape index: {}]
  %s9 = inlined_call_operand.vmem [shape: f32[8,32], index: 9, kind: input, shape index: {}]
  %s10 = inlined_call_operand.vmem [shape: f32[8,32], index: 10, kind: input, shape index: {}]
  %s11 = inlined_call_operand.vmem [shape: f32[64,200], index: 11, kind: input, shape index: {}]
  %s12 = inlined_call_operand.vmem [shape: f32[1,200], index: 12, kind: input, shape index: {}]
  %s13 = inlined_call_operand.vmem [shape: f32[200,5], index: 13, kind: input, shape index: {}]
  %s14 = inlined_call_operand.vmem [shape: f32[1,5], index: 14, kind: input, shape index: {}]
  %s15 = inlined_call_operand.vmem [shape: f32[8,5], index: 15, kind: output, shape index: {}]
  %s16 = sld [smem:[#allocation0]]
  $region70: #{forward.1} parent=0
    _
  %s18 = ssub.s32 1, %s16
  %s19 = scalar_select 0, %s18, %s16
  // Predicated region
  $region2: #{forward.1} parent=0 // pred_check
    _
  $region3: #{forward.1} parent=0 // pred_check_branch
    %21 = sbr.rel (0) target = $region5
  $region4: #{forward.1} parent=0 // pred_region
    _
  $region5: #{forward.1} parent=0 // pred_fallthru
    _
  // Predicated region
  $region6: #{forward.1} parent=0 // pred_check
    _
  $region7: #{forward.1} parent=0 // pred_check_branch
    %23 = sbr.rel (0) target = $region9
  $region8: #{forward.1} parent=0 // pred_region
    _
  $region9: #{forward.1} parent=0 // pred_fallthru
    _
  // Predicated region
  $region10: #{forward.1} parent=0 // pred_check
    _
  $region11: #{forward.1} parent=0 // pred_check_branch
    %25 = sbr.rel (0) target = $region13
  $region12: #{forward.1} parent=0 // pred_region
    _
  $region13: #{forward.1} parent=0 // pred_fallthru
    _
  // Predicated region
  $region14: #{forward.1} parent=0 // pred_check
    _
  $region15: #{forward.1} parent=0 // pred_check_branch
    %27 = sbr.rel (0) target = $region17
  $region16: #{forward.1} parent=0 // pred_region
    _
  $region17: #{forward.1} parent=0 // pred_fallthru
    _
  // Predicated region
  $region18: #{forward.1} parent=0 // pred_check
    _
  $region19: #{forward.1} parent=0 // pred_check_branch
    %29 = sbr.rel (0) target = $region21
  $region20: #{forward.1} parent=0 // pred_region
    _
  $region21: #{forward.1} parent=0 // pred_fallthru
    _
  // Predicated region
  $region22: #{forward.1} parent=0 // pred_check
    _
  $region23: #{forward.1} parent=0 // pred_check_branch
    %31 = sbr.rel (0) target = $region25
  $region24: #{forward.1} parent=0 // pred_region
    _
  $region25: #{forward.1} parent=0 // pred_fallthru
    _
  // Predicated region
  $region26: #{forward.1} parent=0 // pred_check
    _
  $region27: #{forward.1} parent=0 // pred_check_branch
    %33 = sbr.rel (0) target = $region29
  $region28: #{forward.1} parent=0 // pred_region
    _
  $region29: #{forward.1} parent=0 // pred_fallthru
    _
  // Predicated region
  $region30: #{forward.1} parent=0 // pred_check
    _
  $region31: #{forward.1} parent=0 // pred_check_branch
    %35 = sbr.rel (0) target = $region33
  $region32: #{forward.1} parent=0 // pred_region
    _
  $region33: #{forward.1} parent=0 // pred_fallthru
    _
  // Predicated region
  $region34: #{forward.1} parent=0 // pred_check
    _
  $region35: #{forward.1} parent=0 // pred_check_branch
    %37 = sbr.rel (0) target = $region37
  $region36: #{forward.1} parent=0 // pred_region
    _
  $region37: #{forward.1} parent=0 // pred_fallthru
    _
  // Predicated region
  $region38: #{forward.1} parent=0 // pred_check
    _
  $region39: #{forward.1} parent=0 // pred_check_branch
    %39 = sbr.rel (0) target = $region41
  $region40: #{forward.1} parent=0 // pred_region
    _
  $region41: #{forward.1} parent=0 // pred_fallthru
    _
  // Predicated region
  $region42: #{forward.1} parent=0 // pred_check
    _
  $region43: #{forward.1} parent=0 // pred_check_branch
    %41 = sbr.rel (0) target = $region45
  $region44: #{forward.1} parent=0 // pred_region
    _
  $region45: #{forward.1} parent=0 // pred_fallthru
    _
  // Predicated region
  $region46: #{forward.1} parent=0 // pred_check
    _
  $region47: #{forward.1} parent=0 // pred_check_branch
    %43 = sbr.rel (0) target = $region49
  $region48: #{forward.1} parent=0 // pred_region
    _
  $region49: #{forward.1} parent=0 // pred_fallthru
    _
  // Predicated region
  $region50: #{forward.1} parent=0 // pred_check
    _
  $region51: #{forward.1} parent=0 // pred_check_branch
    %45 = sbr.rel (0) target = $region53
  $region52: #{forward.1} parent=0 // pred_region
    _
  $region53: #{forward.1} parent=0 // pred_fallthru
    _
  // Predicated region
  $region54: #{forward.1} parent=0 // pred_check
    _
  $region55: #{forward.1} parent=0 // pred_check_branch
    %47 = sbr.rel (0) target = $region57
  $region56: #{forward.1} parent=0 // pred_region
    _
  $region57: #{forward.1} parent=0 // pred_fallthru
    _
  // Predicated region
  $region58: #{forward.1} parent=0 // pred_check
    _
  $region59: #{forward.1} parent=0 // pred_check_branch
    %49 = sbr.rel (0) target = $region61
  $region60: #{forward.1} parent=0 // pred_region
    _
  $region61: #{forward.1} parent=0 // pred_fallthru
    _
  %v50 = vld [vmem:[%s0] sm:$0xff]
  %v51 = vld [vmem:[%s0 + $0x8] sm:$0xff]
  %v52 = vld [vmem:[%s0 + $0x10] sm:$0xff]
  %v53 = vld [vmem:[%s0 + $0x18] sm:$0xff]
  %v54 = vld [vmem:[%s0 + $0x20] sm:$0xff]
  %v55 = vld [vmem:[%s0 + $0x28] sm:$0xff]
  %v56 = vld [vmem:[%s0 + $0x30] sm:$0xff]
  %v57 = vld [vmem:[%s0 + $0x38] sm:$0xff]
  %v58 = vld [vmem:[%s1] sm:$0xff]
  %v59 = vld [vmem:[%s1 + $0x8] sm:$0xff]
  %v60 = vld [vmem:[%s1 + $0x10] sm:$0xff]
  %v61 = vld [vmem:[%s1 + $0x18] sm:$0xff]
  %v62 = vld [vmem:[%s3] sm:$0x1]
  %v64 = vperm.slane %v62, 0
  %vm66 = vcmask 261120
  %v68 = vsel %vm66, %v50, 0
  %v71 = vsel %vm66, %v51, 0
  %v74 = vsel %vm66, %v52, 0
  %v77 = vsel %vm66, %v53, 0
  %v80 = vsel %vm66, %v54, 0
  %v83 = vsel %vm66, %v55, 0
  %v86 = vsel %vm66, %v56, 0
  %v89 = vsel %vm66, %v57, 0
  %91 = vmatpush.msra.mxu0 0.0
  %92 = vmatpush.msra.mxu0 0.0
  %93 = vmatpush.msra.mxu0 0.0
  %94 = vmatpush.msra.mxu0 0.0
  %95 = vmatpush.msra.mxu0 0.0
  %96 = vmatpush.msra.mxu0 0.0
  %97 = vmatpush.msra.mxu0 0.0
  %98 = vmatpush.msra.mxu0 0.0
  %99 = vmatpush.msra.mxu0 0.0
  %100 = vmatpush.msra.mxu0 0.0
  %101 = vmatpush.msra.mxu0 0.0
  %102 = vmatpush.msra.mxu0 0.0
  %103 = vmatpush.msra.mxu0 %v61
  %104 = vmatpush.msra.mxu0 %v60
  %105 = vmatpush.msra.mxu0 %v59
  %106 = vmatpush.msra.mxu0 %v58
  %107 = vmatmul.f32.gmra.mxu0 %v68
  %v108 = vpop.f32.mrf.mxu0
  %v109 = vadd.f32 %v64, %v108
  %110 = vmatmul.f32.gmra.mxu0 %v71
  %v111 = vpop.f32.mrf.mxu0
  %v112 = vadd.f32 %v64, %v111
  %113 = vmatmul.f32.gmra.mxu0 %v74
  %v114 = vpop.f32.mrf.mxu0
  %v115 = vadd.f32 %v64, %v114
  %116 = vmatmul.f32.gmra.mxu0 %v77
  %v117 = vpop.f32.mrf.mxu0
  %v118 = vadd.f32 %v64, %v117
  %119 = vmatmul.f32.gmra.mxu0 %v80
  %v120 = vpop.f32.mrf.mxu0
  %v121 = vadd.f32 %v64, %v120
  %122 = vmatmul.f32.gmra.mxu0 %v83
  %v123 = vpop.f32.mrf.mxu0
  %v124 = vadd.f32 %v64, %v123
  %125 = vmatmul.f32.gmra.mxu0 %v86
  %v126 = vpop.f32.mrf.mxu0
  %v127 = vadd.f32 %v64, %v126
  %128 = vmatmul.f32.gmra.mxu0 %v89
  %v129 = vpop.f32.mrf.mxu0
  %v130 = vadd.f32 %v64, %v129
  %131 = vdwg.mxu0
  %132 = vst [vmem:[#allocation2] sm:$0xff] %v109
  %133 = vst [vmem:[#allocation2 + $0x8] sm:$0xff] %v112
  %134 = vst [vmem:[#allocation2 + $0x10] sm:$0xff] %v115
  %135 = vst [vmem:[#allocation2 + $0x18] sm:$0xff] %v118
  %136 = vst [vmem:[#allocation2 + $0x20] sm:$0xff] %v121
  %137 = vst [vmem:[#allocation2 + $0x28] sm:$0xff] %v124
  %138 = vst [vmem:[#allocation2 + $0x30] sm:$0xff] %v127
  %139 = vst [vmem:[#allocation2 + $0x38] sm:$0xff] %v130
  %v140 = vld [vmem:[%s2] sm:$0xff]
  %v141 = vld [vmem:[%s2 + $0x8] sm:$0xff]
  %v142 = vld [vmem:[%s2 + $0x10] sm:$0xff]
  %v143 = vld [vmem:[%s2 + $0x18] sm:$0xff]
  %v144 = vld [vmem:[%s7] sm:$0xff]
  %v145 = vld [vmem:[%s8] sm:$0xff]
  %v146 = vld [vmem:[#allocation2] sm:$0xff]
  %v148 = vsel %vm66, %v144, 0
  %150 = vmatpush.msra.mxu0 0.0
  %151 = vmatpush.msra.mxu0 0.0
  %152 = vmatpush.msra.mxu0 0.0
  %153 = vmatpush.msra.mxu0 0.0
  %154 = vmatpush.msra.mxu0 0.0
  %155 = vmatpush.msra.mxu0 0.0
  %156 = vmatpush.msra.mxu0 0.0
  %157 = vmatpush.msra.mxu0 0.0
  %158 = vmatpush.msra.mxu0 0.0
  %159 = vmatpush.msra.mxu0 0.0
  %160 = vmatpush.msra.mxu0 0.0
  %161 = vmatpush.msra.mxu0 0.0
  %162 = vmatpush.msra.mxu0 %v143
  %163 = vmatpush.msra.mxu0 %v142
  %164 = vmatpush.msra.mxu0 %v141
  %165 = vmatpush.msra.mxu0 %v140
  %166 = vmatmul.f32.gmra.mxu0 %v148
  %v167 = vpop.f32.mrf.mxu0
  %v168 = vadd.f32 0.0, %v167
  %169 = vdwg.mxu0
  %v170 = vadd.f32 %v146, %v168
  %v171 = vxor.u32 %v170, 2147483648
  %v172 = vmul.f32 %v171, 1.442695
  %v173 = vpow.pop %v172
  %v174 = vadd.f32 %v173, 1.0
  %v175 = vrcp.pop %v174
  %v176 = vmul.f32 %v174, %v175
  %v177 = vsub.f32 1.0, %v176
  %v178 = vmul.f32 %v175, %v177
  %v179 = vadd.f32 %v175, %v178
  %vm180 = vweird.f32 %v174
  %vm181 = vweird.f32 %v175
  %vm182 = vmor %vm180, %vm181
  %v183 = vsel %vm182, %v175, %v179
  %v184 = vand.u32 2147483647, %v174
  %vm185 = vcmp.eq.f32.partialorder %v184, 8.507059e+37
  %v186 = vand.u32 %v174, 2147483648
  %v187 = vor.u32 1.1754944e-38, %v186
  %v188 = vsel %vm185, %v187, %v183
  %v189 = vmul.f32 1.0, %v188
  %v190 = vtanh.pop %v170
  %192 = vrot.lane.b32.xlu0 %v145, 32
  %v193 = vpop.permute.xlu0 %192
  %v195 = vmul.f32 %v189, %v193
  %197 = vrot.lane.b32.xlu0 %v190, 64
  %v198 = vpop.permute.xlu0 %197
  %v200 = vmul.f32 %v189, %v198
  %202 = vrot.lane.b32.xlu0 %v200, 32
  %v203 = vpop.permute.xlu0 %202
  %v205 = vadd.f32 %v195, %v203
  %v206 = vtanh.pop %v205
  %208 = vrot.lane.b32.xlu0 %v206, 64
  %v209 = vpop.permute.xlu0 %208
  %v211 = vmul.f32 %v189, %v209
  %v212 = vld [vmem:[#allocation2 + $0x8] sm:$0xff]
  %214 = vrot.lane.b32.xlu0 %v211, 32
  %v215 = vpop.permute.xlu0 %214
  %v216 = vsel %vm66, %v215, 0
  %218 = vmatpush.msra.mxu0 0.0
  %219 = vmatpush.msra.mxu0 0.0
  %220 = vmatpush.msra.mxu0 0.0
  %221 = vmatpush.msra.mxu0 0.0
  %222 = vmatpush.msra.mxu0 0.0
  %223 = vmatpush.msra.mxu0 0.0
  %224 = vmatpush.msra.mxu0 0.0
  %225 = vmatpush.msra.mxu0 0.0
  %226 = vmatpush.msra.mxu0 0.0
  %227 = vmatpush.msra.mxu0 0.0
  %228 = vmatpush.msra.mxu0 0.0
  %229 = vmatpush.msra.mxu0 0.0
  %230 = vmatpush.msra.mxu0 %v143
  %231 = vmatpush.msra.mxu0 %v142
  %232 = vmatpush.msra.mxu0 %v141
  %233 = vmatpush.msra.mxu0 %v140
  %234 = vmatmul.f32.gmra.mxu0 %v216
  %v235 = vpop.f32.mrf.mxu0
  %v236 = vadd.f32 0.0, %v235
  %237 = vdwg.mxu0
  %v238 = vadd.f32 %v212, %v236
  %v239 = vxor.u32 %v238, 2147483648
  %v240 = vmul.f32 %v239, 1.442695
  %v241 = vpow.pop %v240
  %v242 = vadd.f32 %v241, 1.0
  %v243 = vrcp.pop %v242
  %v244 = vmul.f32 %v242, %v243
  %v245 = vsub.f32 1.0, %v244
  %v246 = vmul.f32 %v243, %v245
  %v247 = vadd.f32 %v243, %v246
  %vm248 = vweird.f32 %v242
  %vm249 = vweird.f32 %v243
  %vm250 = vmor %vm248, %vm249
  %v251 = vsel %vm250, %v243, %v247
  %v252 = vand.u32 2147483647, %v242
  %vm253 = vcmp.eq.f32.partialorder %v252, 8.507059e+37
  %v254 = vand.u32 %v242, 2147483648
  %v255 = vor.u32 1.1754944e-38, %v254
  %v256 = vsel %vm253, %v255, %v251
  %v257 = vmul.f32 1.0, %v256
  %v258 = vtanh.pop %v238
  %v259 = vmul.f32 %v257, %v205
  %261 = vrot.lane.b32.xlu0 %v258, 64
  %v262 = vpop.permute.xlu0 %261
  %v264 = vmul.f32 %v257, %v262
  %266 = vrot.lane.b32.xlu0 %v264, 32
  %v267 = vpop.permute.xlu0 %266
  %v269 = vadd.f32 %v259, %v267
  %v270 = vtanh.pop %v269
  %272 = vrot.lane.b32.xlu0 %v270, 64
  %v273 = vpop.permute.xlu0 %272
  %v275 = vmul.f32 %v257, %v273
  %v276 = vld [vmem:[#allocation2 + $0x10] sm:$0xff]
  %278 = vrot.lane.b32.xlu0 %v275, 32
  %v279 = vpop.permute.xlu0 %278
  %v280 = vsel %vm66, %v279, 0
  %282 = vmatpush.msra.mxu0 0.0
  %283 = vmatpush.msra.mxu0 0.0
  %284 = vmatpush.msra.mxu0 0.0
  %285 = vmatpush.msra.mxu0 0.0
  %286 = vmatpush.msra.mxu0 0.0
  %287 = vmatpush.msra.mxu0 0.0
  %288 = vmatpush.msra.mxu0 0.0
  %289 = vmatpush.msra.mxu0 0.0
  %290 = vmatpush.msra.mxu0 0.0
  %291 = vmatpush.msra.mxu0 0.0
  %292 = vmatpush.msra.mxu0 0.0
  %293 = vmatpush.msra.mxu0 0.0
  %294 = vmatpush.msra.mxu0 %v143
  %295 = vmatpush.msra.mxu0 %v142
  %296 = vmatpush.msra.mxu0 %v141
  %297 = vmatpush.msra.mxu0 %v140
  %298 = vmatmul.f32.gmra.mxu0 %v280
  %v299 = vpop.f32.mrf.mxu0
  %v300 = vadd.f32 0.0, %v299
  %301 = vdwg.mxu0
  %v302 = vadd.f32 %v276, %v300
  %v303 = vxor.u32 %v302, 2147483648
  %v304 = vmul.f32 %v303, 1.442695
  %v305 = vpow.pop %v304
  %v306 = vadd.f32 %v305, 1.0
  %v307 = vrcp.pop %v306
  %v308 = vmul.f32 %v306, %v307
  %v309 = vsub.f32 1.0, %v308
  %v310 = vmul.f32 %v307, %v309
  %v311 = vadd.f32 %v307, %v310
  %vm312 = vweird.f32 %v306
  %vm313 = vweird.f32 %v307
  %vm314 = vmor %vm312, %vm313
  %v315 = vsel %vm314, %v307, %v311
  %v316 = vand.u32 2147483647, %v306
  %vm317 = vcmp.eq.f32.partialorder %v316, 8.507059e+37
  %v318 = vand.u32 %v306, 2147483648
  %v319 = vor.u32 1.1754944e-38, %v318
  %v320 = vsel %vm317, %v319, %v315
  %v321 = vmul.f32 1.0, %v320
  %v322 = vtanh.pop %v302
  %v323 = vmul.f32 %v321, %v269
  %325 = vrot.lane.b32.xlu0 %v322, 64
  %v326 = vpop.permute.xlu0 %325
  %v328 = vmul.f32 %v321, %v326
  %330 = vrot.lane.b32.xlu0 %v328, 32
  %v331 = vpop.permute.xlu0 %330
  %v333 = vadd.f32 %v323, %v331
  %v334 = vtanh.pop %v333
  %336 = vrot.lane.b32.xlu0 %v334, 64
  %v337 = vpop.permute.xlu0 %336
  %v339 = vmul.f32 %v321, %v337
  %v340 = vld [vmem:[#allocation2 + $0x18] sm:$0xff]
  %342 = vrot.lane.b32.xlu0 %v339, 32
  %v343 = vpop.permute.xlu0 %342
  %v344 = vsel %vm66, %v343, 0
  %346 = vmatpush.msra.mxu0 0.0
  %347 = vmatpush.msra.mxu0 0.0
  %348 = vmatpush.msra.mxu0 0.0
  %349 = vmatpush.msra.mxu0 0.0
  %350 = vmatpush.msra.mxu0 0.0
  %351 = vmatpush.msra.mxu0 0.0
  %352 = vmatpush.msra.mxu0 0.0
  %353 = vmatpush.msra.mxu0 0.0
  %354 = vmatpush.msra.mxu0 0.0
  %355 = vmatpush.msra.mxu0 0.0
  %356 = vmatpush.msra.mxu0 0.0
  %357 = vmatpush.msra.mxu0 0.0
  %358 = vmatpush.msra.mxu0 %v143
  %359 = vmatpush.msra.mxu0 %v142
  %360 = vmatpush.msra.mxu0 %v141
  %361 = vmatpush.msra.mxu0 %v140
  %362 = vmatmul.f32.gmra.mxu0 %v344
  %v363 = vpop.f32.mrf.mxu0
  %v364 = vadd.f32 0.0, %v363
  %365 = vdwg.mxu0
  %v366 = vadd.f32 %v340, %v364
  %v367 = vxor.u32 %v366, 2147483648
  %v368 = vmul.f32 %v367, 1.442695
  %v369 = vpow.pop %v368
  %v370 = vadd.f32 %v369, 1.0
  %v371 = vrcp.pop %v370
  %v372 = vmul.f32 %v370, %v371
  %v373 = vsub.f32 1.0, %v372
  %v374 = vmul.f32 %v371, %v373
  %v375 = vadd.f32 %v371, %v374
  %vm376 = vweird.f32 %v370
  %vm377 = vweird.f32 %v371
  %vm378 = vmor %vm376, %vm377
  %v379 = vsel %vm378, %v371, %v375
  %v380 = vand.u32 2147483647, %v370
  %vm381 = vcmp.eq.f32.partialorder %v380, 8.507059e+37
  %v382 = vand.u32 %v370, 2147483648
  %v383 = vor.u32 1.1754944e-38, %v382
  %v384 = vsel %vm381, %v383, %v379
  %v385 = vmul.f32 1.0, %v384
  %v386 = vtanh.pop %v366
  %v387 = vmul.f32 %v385, %v333
  %389 = vrot.lane.b32.xlu0 %v386, 64
  %v390 = vpop.permute.xlu0 %389
  %v392 = vmul.f32 %v385, %v390
  %394 = vrot.lane.b32.xlu0 %v392, 32
  %v395 = vpop.permute.xlu0 %394
  %v397 = vadd.f32 %v387, %v395
  %v398 = vtanh.pop %v397
  %400 = vrot.lane.b32.xlu0 %v398, 64
  %v401 = vpop.permute.xlu0 %400
  %v403 = vmul.f32 %v385, %v401
  %v404 = vld [vmem:[#allocation2 + $0x20] sm:$0xff]
  %406 = vrot.lane.b32.xlu0 %v403, 32
  %v407 = vpop.permute.xlu0 %406
  %v408 = vsel %vm66, %v407, 0
  %410 = vmatpush.msra.mxu0 0.0
  %411 = vmatpush.msra.mxu0 0.0
  %412 = vmatpush.msra.mxu0 0.0
  %413 = vmatpush.msra.mxu0 0.0
  %414 = vmatpush.msra.mxu0 0.0
  %415 = vmatpush.msra.mxu0 0.0
  %416 = vmatpush.msra.mxu0 0.0
  %417 = vmatpush.msra.mxu0 0.0
  %418 = vmatpush.msra.mxu0 0.0
  %419 = vmatpush.msra.mxu0 0.0
  %420 = vmatpush.msra.mxu0 0.0
  %421 = vmatpush.msra.mxu0 0.0
  %422 = vmatpush.msra.mxu0 %v143
  %423 = vmatpush.msra.mxu0 %v142
  %424 = vmatpush.msra.mxu0 %v141
  %425 = vmatpush.msra.mxu0 %v140
  %426 = vmatmul.f32.gmra.mxu0 %v408
  %v427 = vpop.f32.mrf.mxu0
  %v428 = vadd.f32 0.0, %v427
  %429 = vdwg.mxu0
  %v430 = vadd.f32 %v404, %v428
  %v431 = vxor.u32 %v430, 2147483648
  %v432 = vmul.f32 %v431, 1.442695
  %v433 = vpow.pop %v432
  %v434 = vadd.f32 %v433, 1.0
  %v435 = vrcp.pop %v434
  %v436 = vmul.f32 %v434, %v435
  %v437 = vsub.f32 1.0, %v436
  %v438 = vmul.f32 %v435, %v437
  %v439 = vadd.f32 %v435, %v438
  %vm440 = vweird.f32 %v434
  %vm441 = vweird.f32 %v435
  %vm442 = vmor %vm440, %vm441
  %v443 = vsel %vm442, %v435, %v439
  %v444 = vand.u32 2147483647, %v434
  %vm445 = vcmp.eq.f32.partialorder %v444, 8.507059e+37
  %v446 = vand.u32 %v434, 2147483648
  %v447 = vor.u32 1.1754944e-38, %v446
  %v448 = vsel %vm445, %v447, %v443
  %v449 = vmul.f32 1.0, %v448
  %v450 = vtanh.pop %v430
  %v451 = vmul.f32 %v449, %v397
  %453 = vrot.lane.b32.xlu0 %v450, 64
  %v454 = vpop.permute.xlu0 %453
  %v456 = vmul.f32 %v449, %v454
  %458 = vrot.lane.b32.xlu0 %v456, 32
  %v459 = vpop.permute.xlu0 %458
  %v461 = vadd.f32 %v451, %v459
  %v462 = vtanh.pop %v461
  %464 = vrot.lane.b32.xlu0 %v462, 64
  %v465 = vpop.permute.xlu0 %464
  %v467 = vmul.f32 %v449, %v465
  %v468 = vld [vmem:[#allocation2 + $0x28] sm:$0xff]
  %470 = vrot.lane.b32.xlu0 %v467, 32
  %v471 = vpop.permute.xlu0 %470
  %v472 = vsel %vm66, %v471, 0
  %474 = vmatpush.msra.mxu0 0.0
  %475 = vmatpush.msra.mxu0 0.0
  %476 = vmatpush.msra.mxu0 0.0
  %477 = vmatpush.msra.mxu0 0.0
  %478 = vmatpush.msra.mxu0 0.0
  %479 = vmatpush.msra.mxu0 0.0
  %480 = vmatpush.msra.mxu0 0.0
  %481 = vmatpush.msra.mxu0 0.0
  %482 = vmatpush.msra.mxu0 0.0
  %483 = vmatpush.msra.mxu0 0.0
  %484 = vmatpush.msra.mxu0 0.0
  %485 = vmatpush.msra.mxu0 0.0
  %486 = vmatpush.msra.mxu0 %v143
  %487 = vmatpush.msra.mxu0 %v142
  %488 = vmatpush.msra.mxu0 %v141
  %489 = vmatpush.msra.mxu0 %v140
  %490 = vmatmul.f32.gmra.mxu0 %v472
  %v491 = vpop.f32.mrf.mxu0
  %v492 = vadd.f32 0.0, %v491
  %493 = vdwg.mxu0
  %v494 = vadd.f32 %v468, %v492
  %v495 = vxor.u32 %v494, 2147483648
  %v496 = vmul.f32 %v495, 1.442695
  %v497 = vpow.pop %v496
  %v498 = vadd.f32 %v497, 1.0
  %v499 = vrcp.pop %v498
  %v500 = vmul.f32 %v498, %v499
  %v501 = vsub.f32 1.0, %v500
  %v502 = vmul.f32 %v499, %v501
  %v503 = vadd.f32 %v499, %v502
  %vm504 = vweird.f32 %v498
  %vm505 = vweird.f32 %v499
  %vm506 = vmor %vm504, %vm505
  %v507 = vsel %vm506, %v499, %v503
  %v508 = vand.u32 2147483647, %v498
  %vm509 = vcmp.eq.f32.partialorder %v508, 8.507059e+37
  %v510 = vand.u32 %v498, 2147483648
  %v511 = vor.u32 1.1754944e-38, %v510
  %v512 = vsel %vm509, %v511, %v507
  %v513 = vmul.f32 1.0, %v512
  %v514 = vtanh.pop %v494
  %v515 = vmul.f32 %v513, %v461
  %517 = vrot.lane.b32.xlu0 %v514, 64
  %v518 = vpop.permute.xlu0 %517
  %v520 = vmul.f32 %v513, %v518
  %522 = vrot.lane.b32.xlu0 %v520, 32
  %v523 = vpop.permute.xlu0 %522
  %v525 = vadd.f32 %v515, %v523
  %v526 = vtanh.pop %v525
  %528 = vrot.lane.b32.xlu0 %v526, 64
  %v529 = vpop.permute.xlu0 %528
  %v531 = vmul.f32 %v513, %v529
  %v532 = vld [vmem:[#allocation2 + $0x30] sm:$0xff]
  %534 = vrot.lane.b32.xlu0 %v531, 32
  %v535 = vpop.permute.xlu0 %534
  %v536 = vsel %vm66, %v535, 0
  %538 = vmatpush.msra.mxu0 0.0
  %539 = vmatpush.msra.mxu0 0.0
  %540 = vmatpush.msra.mxu0 0.0
  %541 = vmatpush.msra.mxu0 0.0
  %542 = vmatpush.msra.mxu0 0.0
  %543 = vmatpush.msra.mxu0 0.0
  %544 = vmatpush.msra.mxu0 0.0
  %545 = vmatpush.msra.mxu0 0.0
  %546 = vmatpush.msra.mxu0 0.0
  %547 = vmatpush.msra.mxu0 0.0
  %548 = vmatpush.msra.mxu0 0.0
  %549 = vmatpush.msra.mxu0 0.0
  %550 = vmatpush.msra.mxu0 %v143
  %551 = vmatpush.msra.mxu0 %v142
  %552 = vmatpush.msra.mxu0 %v141
  %553 = vmatpush.msra.mxu0 %v140
  %554 = vmatmul.f32.gmra.mxu0 %v536
  %v555 = vpop.f32.mrf.mxu0
  %v556 = vadd.f32 0.0, %v555
  %557 = vdwg.mxu0
  %v558 = vadd.f32 %v532, %v556
  %v559 = vxor.u32 %v558, 2147483648
  %v560 = vmul.f32 %v559, 1.442695
  %v561 = vpow.pop %v560
  %v562 = vadd.f32 %v561, 1.0
  %v563 = vrcp.pop %v562
  %v564 = vmul.f32 %v562, %v563
  %v565 = vsub.f32 1.0, %v564
  %v566 = vmul.f32 %v563, %v565
  %v567 = vadd.f32 %v563, %v566
  %vm568 = vweird.f32 %v562
  %vm569 = vweird.f32 %v563
  %vm570 = vmor %vm568, %vm569
  %v571 = vsel %vm570, %v563, %v567
  %v572 = vand.u32 2147483647, %v562
  %vm573 = vcmp.eq.f32.partialorder %v572, 8.507059e+37
  %v574 = vand.u32 %v562, 2147483648
  %v575 = vor.u32 1.1754944e-38, %v574
  %v576 = vsel %vm573, %v575, %v571
  %v577 = vmul.f32 1.0, %v576
  %v578 = vtanh.pop %v558
  %v579 = vmul.f32 %v577, %v525
  %581 = vrot.lane.b32.xlu0 %v578, 64
  %v582 = vpop.permute.xlu0 %581
  %v584 = vmul.f32 %v577, %v582
  %586 = vrot.lane.b32.xlu0 %v584, 32
  %v587 = vpop.permute.xlu0 %586
  %v589 = vadd.f32 %v579, %v587
  %v590 = vtanh.pop %v589
  %592 = vrot.lane.b32.xlu0 %v590, 64
  %v593 = vpop.permute.xlu0 %592
  %v595 = vmul.f32 %v577, %v593
  %v596 = vld [vmem:[#allocation2 + $0x38] sm:$0xff]
  %598 = vrot.lane.b32.xlu0 %v595, 32
  %v599 = vpop.permute.xlu0 %598
  %v600 = vsel %vm66, %v599, 0
  %602 = vmatpush.msra.mxu0 0.0
  %603 = vmatpush.msra.mxu0 0.0
  %604 = vmatpush.msra.mxu0 0.0
  %605 = vmatpush.msra.mxu0 0.0
  %606 = vmatpush.msra.mxu0 0.0
  %607 = vmatpush.msra.mxu0 0.0
  %608 = vmatpush.msra.mxu0 0.0
  %609 = vmatpush.msra.mxu0 0.0
  %610 = vmatpush.msra.mxu0 0.0
  %611 = vmatpush.msra.mxu0 0.0
  %612 = vmatpush.msra.mxu0 0.0
  %613 = vmatpush.msra.mxu0 0.0
  %614 = vmatpush.msra.mxu0 %v143
  %615 = vmatpush.msra.mxu0 %v142
  %616 = vmatpush.msra.mxu0 %v141
  %617 = vmatpush.msra.mxu0 %v140
  %618 = vmatmul.f32.gmra.mxu0 %v600
  %v619 = vpop.f32.mrf.mxu0
  %v620 = vadd.f32 0.0, %v619
  %621 = vdwg.mxu0
  %v622 = vadd.f32 %v596, %v620
  %v623 = vxor.u32 %v622, 2147483648
  %v624 = vmul.f32 %v623, 1.442695
  %v625 = vpow.pop %v624
  %v626 = vadd.f32 %v625, 1.0
  %v627 = vrcp.pop %v626
  %v628 = vmul.f32 %v626, %v627
  %v629 = vsub.f32 1.0, %v628
  %v630 = vmul.f32 %v627, %v629
  %v631 = vadd.f32 %v627, %v630
  %vm632 = vweird.f32 %v626
  %vm633 = vweird.f32 %v627
  %vm634 = vmor %vm632, %vm633
  %v635 = vsel %vm634, %v627, %v631
  %v636 = vand.u32 2147483647, %v626
  %vm637 = vcmp.eq.f32.partialorder %v636, 8.507059e+37
  %v638 = vand.u32 %v626, 2147483648
  %v639 = vor.u32 1.1754944e-38, %v638
  %v640 = vsel %vm637, %v639, %v635
  %v641 = vmul.f32 1.0, %v640
  %v642 = vtanh.pop %v622
  %v643 = vmul.f32 %v641, %v589
  %645 = vrot.lane.b32.xlu0 %v642, 64
  %v646 = vpop.permute.xlu0 %645
  %v648 = vmul.f32 %v641, %v646
  %650 = vrot.lane.b32.xlu0 %v648, 32
  %v651 = vpop.permute.xlu0 %650
  %v653 = vadd.f32 %v643, %v651
  %v654 = vtanh.pop %v653
  %656 = vrot.lane.b32.xlu0 %v654, 64
  %v657 = vpop.permute.xlu0 %656
  %v659 = vmul.f32 %v641, %v657
  %v660 = vld [vmem:[%s0 + $0x38] sm:$0xff]
  %v661 = vld [vmem:[%s4] sm:$0xff]
  %v662 = vld [vmem:[%s4 + $0x8] sm:$0xff]
  %v663 = vld [vmem:[%s4 + $0x10] sm:$0xff]
  %v664 = vld [vmem:[%s4 + $0x18] sm:$0xff]
  %v665 = vld [vmem:[%s9] sm:$0xff]
  %v666 = vld [vmem:[%s5] sm:$0xff]
  %v667 = vld [vmem:[%s5 + $0x8] sm:$0xff]
  %v668 = vld [vmem:[%s5 + $0x10] sm:$0xff]
  %v669 = vld [vmem:[%s5 + $0x18] sm:$0xff]
  %v671 = vsel %vm66, %v665, 0
  %673 = vmatpush.msra.mxu0 0.0
  %674 = vmatpush.msra.mxu0 0.0
  %675 = vmatpush.msra.mxu0 0.0
  %676 = vmatpush.msra.mxu0 0.0
  %677 = vmatpush.msra.mxu0 0.0
  %678 = vmatpush.msra.mxu0 0.0
  %679 = vmatpush.msra.mxu0 0.0
  %680 = vmatpush.msra.mxu0 0.0
  %681 = vmatpush.msra.mxu0 0.0
  %682 = vmatpush.msra.mxu0 0.0
  %683 = vmatpush.msra.mxu0 0.0
  %684 = vmatpush.msra.mxu0 0.0
  %685 = vmatpush.msra.mxu0 %v669
  %686 = vmatpush.msra.mxu0 %v668
  %687 = vmatpush.msra.mxu0 %v667
  %688 = vmatpush.msra.mxu0 %v666
  %689 = vmatmul.f32.gmra.mxu0 %v671
  %v690 = vpop.f32.mrf.mxu0
  %v691 = vadd.f32 0.0, %v690
  %692 = vdwg.mxu0
  %v694 = vsel %vm66, %v660, 0
  %696 = vmatpush.msra.mxu0 0.0
  %697 = vmatpush.msra.mxu0 0.0
  %698 = vmatpush.msra.mxu0 0.0
  %699 = vmatpush.msra.mxu0 0.0
  %700 = vmatpush.msra.mxu0 0.0
  %701 = vmatpush.msra.mxu0 0.0
  %702 = vmatpush.msra.mxu0 0.0
  %703 = vmatpush.msra.mxu0 0.0
  %704 = vmatpush.msra.mxu0 0.0
  %705 = vmatpush.msra.mxu0 0.0
  %706 = vmatpush.msra.mxu0 0.0
  %707 = vmatpush.msra.mxu0 0.0
  %708 = vmatpush.msra.mxu0 %v664
  %709 = vmatpush.msra.mxu0 %v663
  %710 = vmatpush.msra.mxu0 %v662
  %711 = vmatpush.msra.mxu0 %v661
  %712 = vmatmul.f32.gmra.mxu0 %v694
  %v713 = vpop.f32.mrf.mxu0
  %v714 = vadd.f32 %v691, %v713
  %715 = vdwg.mxu0
  %v716 = vld [vmem:[%s6] sm:$0x1]
  %v718 = vperm.slane %v716, 0
  %v720 = vadd.f32 %v714, %v718
  %v721 = vld [vmem:[%s10] sm:$0xff]
  %v722 = vxor.u32 %v720, 2147483648
  %v723 = vmul.f32 %v722, 1.442695
  %v724 = vpow.pop %v723
  %v725 = vadd.f32 %v724, 1.0
  %v726 = vrcp.pop %v725
  %v727 = vmul.f32 %v725, %v726
  %v728 = vsub.f32 1.0, %v727
  %v729 = vmul.f32 %v726, %v728
  %v730 = vadd.f32 %v726, %v729
  %vm731 = vweird.f32 %v725
  %vm732 = vweird.f32 %v726
  %vm733 = vmor %vm731, %vm732
  %v734 = vsel %vm733, %v726, %v730
  %v735 = vand.u32 2147483647, %v725
  %vm736 = vcmp.eq.f32.partialorder %v735, 8.507059e+37
  %v737 = vand.u32 %v725, 2147483648
  %v738 = vor.u32 1.1754944e-38, %v737
  %v739 = vsel %vm736, %v738, %v734
  %v740 = vmul.f32 1.0, %v739
  %v741 = vtanh.pop %v720
  %743 = vrot.lane.b32.xlu0 %v721, 32
  %v744 = vpop.permute.xlu0 %743
  %v746 = vmul.f32 %v740, %v744
  %748 = vrot.lane.b32.xlu0 %v741, 64
  %v749 = vpop.permute.xlu0 %748
  %v751 = vmul.f32 %v740, %v749
  %753 = vrot.lane.b32.xlu0 %v751, 32
  %v754 = vpop.permute.xlu0 %753
  %v756 = vadd.f32 %v746, %v754
  %v757 = vtanh.pop %v756
  %759 = vrot.lane.b32.xlu0 %v757, 64
  %v760 = vpop.permute.xlu0 %759
  %v762 = vmul.f32 %v740, %v760
  %764 = vrot.lane.b32.xlu0 %v659, 32
  %v765 = vpop.permute.xlu0 %764
  %768 = vrot.lane.b32.xlu0 %v762, 64
  %v769 = vpop.permute.xlu0 %768
  %v771 = vsel %vm66, %v765, %v769
  %v772 = vld [vmem:[%s11] sm:$0xff]
  %v773 = vld [vmem:[%s11 + $0x8] sm:$0xff]
  %v774 = vld [vmem:[%s11 + $0x10] sm:$0xff]
  %v775 = vld [vmem:[%s11 + $0x18] sm:$0xff]
  %v776 = vld [vmem:[%s11 + $0x20] sm:$0xff]
  %v777 = vld [vmem:[%s11 + $0x28] sm:$0xff]
  %v778 = vld [vmem:[%s11 + $0x30] sm:$0xff]
  %v779 = vld [vmem:[%s11 + $0x38] sm:$0xff]
  %v780 = vld [vmem:[%s11 + $0x40] sm:$0xff]
  %v781 = vld [vmem:[%s11 + $0x48] sm:$0xff]
  %v782 = vld [vmem:[%s11 + $0x50] sm:$0xff]
  %v783 = vld [vmem:[%s11 + $0x58] sm:$0xff]
  %v784 = vld [vmem:[%s11 + $0x60] sm:$0xff]
  %v785 = vld [vmem:[%s11 + $0x68] sm:$0xff]
  %v786 = vld [vmem:[%s11 + $0x70] sm:$0xff]
  %v787 = vld [vmem:[%s11 + $0x78] sm:$0xff]
  %v788 = vld [vmem:[%s12] sm:$0x3]
  %v790 = vperm.slane %v788, 0
  %v791 = vperm.slane %v788, 1
  %vm794 = vcmask 523264
  %v796 = vsel %vm794, %v771, 0
  %798 = vmatpush.msra.mxu0 0.0
  %799 = vmatpush.msra.mxu0 0.0
  %800 = vmatpush.msra.mxu0 0.0
  %801 = vmatpush.msra.mxu0 0.0
  %802 = vmatpush.msra.mxu0 0.0
  %803 = vmatpush.msra.mxu0 0.0
  %804 = vmatpush.msra.mxu0 0.0
  %805 = vmatpush.msra.mxu0 0.0
  %806 = vmatpush.msra.mxu0 %v786
  %807 = vmatpush.msra.mxu0 %v784
  %808 = vmatpush.msra.mxu0 %v782
  %809 = vmatpush.msra.mxu0 %v780
  %810 = vmatpush.msra.mxu0 %v778
  %811 = vmatpush.msra.mxu0 %v776
  %812 = vmatpush.msra.mxu0 %v774
  %813 = vmatpush.msra.mxu0 %v772
  %814 = vmatmul.f32.gmra.mxu0 %v796
  %v815 = vpop.f32.mrf.mxu0
  %v816 = vadd.f32 %v790, %v815
  %817 = vdwg.mxu0
  %818 = vmatpush.msra.mxu0 0.0
  %819 = vmatpush.msra.mxu0 0.0
  %820 = vmatpush.msra.mxu0 0.0
  %821 = vmatpush.msra.mxu0 0.0
  %822 = vmatpush.msra.mxu0 0.0
  %823 = vmatpush.msra.mxu0 0.0
  %824 = vmatpush.msra.mxu0 0.0
  %825 = vmatpush.msra.mxu0 0.0
  %826 = vmatpush.msra.mxu0 %v787
  %827 = vmatpush.msra.mxu0 %v785
  %828 = vmatpush.msra.mxu0 %v783
  %829 = vmatpush.msra.mxu0 %v781
  %830 = vmatpush.msra.mxu0 %v779
  %831 = vmatpush.msra.mxu0 %v777
  %832 = vmatpush.msra.mxu0 %v775
  %833 = vmatpush.msra.mxu0 %v773
  %834 = vmatmul.f32.gmra.mxu0 %v796
  %v835 = vpop.f32.mrf.mxu0
  %v836 = vadd.f32 %v791, %v835
  %837 = vdwg.mxu0
  %v838 = vmax.f32 %v816, 0.0
  %v839 = vmax.f32 %v836, 0.0
  %v840 = vld [vmem:[%s13] sm:$0xff]
  %v841 = vld [vmem:[%s13 + $0x8] sm:$0xff]
  %v842 = vld [vmem:[%s13 + $0x10] sm:$0xff]
  %v843 = vld [vmem:[%s13 + $0x18] sm:$0xff]
  %v844 = vld [vmem:[%s13 + $0x20] sm:$0xff]
  %v845 = vld [vmem:[%s13 + $0x28] sm:$0xff]
  %v846 = vld [vmem:[%s13 + $0x30] sm:$0xff]
  %v847 = vld [vmem:[%s13 + $0x38] sm:$0xff]
  %v848 = vld [vmem:[%s13 + $0x40] sm:$0xff]
  %v849 = vld [vmem:[%s13 + $0x48] sm:$0xff]
  %v850 = vld [vmem:[%s13 + $0x50] sm:$0xff]
  %v851 = vld [vmem:[%s13 + $0x58] sm:$0xff]
  %v852 = vld [vmem:[%s13 + $0x60] sm:$0xff]
  %v853 = vld [vmem:[%s13 + $0x68] sm:$0xff]
  %v854 = vld [vmem:[%s13 + $0x70] sm:$0xff]
  %v855 = vld [vmem:[%s13 + $0x78] sm:$0xff]
  %v856 = vld [vmem:[%s13 + $0x80] sm:$0xff]
  %v857 = vld [vmem:[%s13 + $0x88] sm:$0xff]
  %v858 = vld [vmem:[%s13 + $0x90] sm:$0xff]
  %v859 = vld [vmem:[%s13 + $0x98] sm:$0xff]
  %v860 = vld [vmem:[%s13 + $0xa0] sm:$0xff]
  %v861 = vld [vmem:[%s13 + $0xa8] sm:$0xff]
  %v862 = vld [vmem:[%s13 + $0xb0] sm:$0xff]
  %v863 = vld [vmem:[%s13 + $0xb8] sm:$0xff]
  %v864 = vld [vmem:[%s13 + $0xc0] sm:$0xff]
  %v865 = vld [vmem:[%s14] sm:$0x1]
  %v867 = vperm.slane %v865, 0
  %vm869 = vcmask 588800
  %v871 = vsel %vm869, %v839, 0
  %873 = vmatpush.msra.mxu0 %v855
  %874 = vmatpush.msra.mxu0 %v854
  %875 = vmatpush.msra.mxu0 %v853
  %876 = vmatpush.msra.mxu0 %v852
  %877 = vmatpush.msra.mxu0 %v851
  %878 = vmatpush.msra.mxu0 %v850
  %879 = vmatpush.msra.mxu0 %v849
  %880 = vmatpush.msra.mxu0 %v848
  %881 = vmatpush.msra.mxu0 %v847
  %882 = vmatpush.msra.mxu0 %v846
  %883 = vmatpush.msra.mxu0 %v845
  %884 = vmatpush.msra.mxu0 %v844
  %885 = vmatpush.msra.mxu0 %v843
  %886 = vmatpush.msra.mxu0 %v842
  %887 = vmatpush.msra.mxu0 %v841
  %888 = vmatpush.msra.mxu0 %v840
  %889 = vmatmul.f32.gmra.mxu0 %v838
  %v890 = vpop.f32.mrf.mxu0
  %v891 = vadd.f32 %v867, %v890
  %892 = vdwg.mxu0
  %893 = vmatpush.msra.mxu0 0.0
  %894 = vmatpush.msra.mxu0 0.0
  %895 = vmatpush.msra.mxu0 0.0
  %896 = vmatpush.msra.mxu0 0.0
  %897 = vmatpush.msra.mxu0 0.0
  %898 = vmatpush.msra.mxu0 0.0
  %899 = vmatpush.msra.mxu0 0.0
  %900 = vmatpush.msra.mxu0 %v864
  %901 = vmatpush.msra.mxu0 %v863
  %902 = vmatpush.msra.mxu0 %v862
  %903 = vmatpush.msra.mxu0 %v861
  %904 = vmatpush.msra.mxu0 %v860
  %905 = vmatpush.msra.mxu0 %v859
  %906 = vmatpush.msra.mxu0 %v858
  %907 = vmatpush.msra.mxu0 %v857
  %908 = vmatpush.msra.mxu0 %v856
  %909 = vmatmul.f32.gmra.mxu0 %v871
  %v910 = vpop.f32.mrf.mxu0
  %v911 = vadd.f32 %v891, %v910
  %912 = vdwg.mxu0
  %vm913 = vcmask 39936
  %v914 = vsel %vm913, %v911, -inf
  %915 = vmax.xlane.f32.xlu0 %v914
  %v916 = vpop.xlane.xlu0 %915
  %v917 = vsub.f32 %v911, %v916
  %v918 = vmul.f32 %v917, 1.442695
  %v919 = vpow.pop %v918
  %v920 = vsel %vm913, %v919, 0.0
  %921 = vadd.xlane.f32.xlu0 %v920
  %v922 = vpop.xlane.xlu0 %921
  %v923 = vrcp.pop %v922
  %v924 = vmul.f32 %v922, %v923
  %v925 = vsub.f32 1.0, %v924
  %v926 = vmul.f32 %v923, %v925
  %v927 = vadd.f32 %v923, %v926
  %vm928 = vweird.f32 %v922
  %vm929 = vweird.f32 %v923
  %vm930 = vmor %vm928, %vm929
  %v931 = vsel %vm930, %v923, %v927
  %v932 = vand.u32 2147483647, %v922
  %vm933 = vcmp.eq.f32.partialorder %v932, 8.507059e+37
  %v934 = vand.u32 %v922, 2147483648
  %v935 = vor.u32 1.1754944e-38, %v934
  %v936 = vsel %vm933, %v935, %v931
  %v937 = vmul.f32 %v919, %v936
  %938 = vst.msk [vmem:[%s15] sm:$0xff] %vm913, %v937
  // Predicated region
  $region62: #{forward.1} parent=0 // pred_check
    _
  $region63: #{forward.1} parent=0 // pred_check_branch
    %940 = sbr.rel (0) target = $region65
  $region64: #{forward.1} parent=0 // pred_region
    _
  $region65: #{forward.1} parent=0 // pred_fallthru
    _
  // Predicated region
  $region66: #{forward.1} parent=0 // pred_check
    _
  $region67: #{forward.1} parent=0 // pred_check_branch
    %942 = sbr.rel (0) target = $region69
  $region68: #{forward.1} parent=0 // pred_region
    _
  $region69: #{forward.1} parent=0 // pred_fallthru
    _

</llo_original>
